<compile_context>
chip_gen: v7x
topology: tpu7x:2x2x1
jax: 0.10.0
libtpu: 0.0.40
codegen_flags: <defaults>
</compile_context>

<pallas_src>
import functools

import jax
import jax.numpy as jnp
from jax.experimental import pallas as pl
from jax.experimental.pallas import tpu as pltpu

NEG_SLOPE = 0.01  # F.leaky_relu default negative_slope


def _leaky_relu(x):
    return jnp.where(x >= 0, x, NEG_SLOPE * x)


def _round_up(x, m):
    return ((x + m - 1) // m) * m


def _layout(D, H, L):
    """Column layout of the packed weight/bias slab.

    Segments (fc11, fc12, enc-head, fc3, fc41, dec-head) each start on a
    128-lane boundary so in-kernel slices are lane-aligned views.
    Returns (starts, widths, kdims, w_tot) as Python ints.
    """
    DD = D * D
    widths = [H, H, 2 * L, H, H, DD + 2 * D]
    kdims = [D, H, H, L, H, H]
    starts, off = [], 0
    for w in widths:
        starts.append(off)
        off += _round_up(w, 128)
    return starts, widths, kdims, off


# ---------------------------------------------------------------------------
# Kernel: whole VAE forward chain (6 fused matmuls) on one VMEM-resident tile.
# ---------------------------------------------------------------------------
def vae_fused_kernel(x_ref, eps_ref, w_ref, b_ref, out_ref, *, D, H, L, seg):
    f32 = jnp.float32
    DD = D * D
    s11, s12, senc, s3, s41, sdec = seg
    wdt = w_ref.dtype  # bf16 (production) or f32 (validation path)

    def lin(h, kdim, start, n):
        wk = w_ref[0:kdim, start:start + n]          # lane-aligned start
        return (jnp.dot(h.astype(wdt), wk, preferred_element_type=f32)
                + b_ref[:, start:start + n])

    x = x_ref[...]
    eps = eps_ref[...]

    # ----- encode -----
    h1 = jnp.tanh(lin(x, D, s11, H))
    h1 = _leaky_relu(lin(h1, H, s12, H))
    enc = lin(h1, H, senc, 2 * L)                    # (TB, 2L) = [mu | logvar]
    mu = enc[:, 0:L]
    logvar = enc[:, L:2 * L]

    # ----- reparameterize (f32) -----
    z = mu + eps * jnp.exp(0.5 * logvar)

    # ----- decode -----
    h3 = _leaky_relu(lin(z, L, s3, H))
    h3 = jnp.tanh(lin(h3, H, s41, H))
    dec = lin(h3, H, sdec, DD + 2 * D)               # [lower_flat | dec_mu | log_diag]

    # exp() the log-diag columns in place (column-index mask) so the whole
    # (TB, DD+2D) block goes out in a single lane-dense store.
    col = jax.lax.broadcasted_iota(jnp.int32, dec.shape, 1)
    dec = jnp.where(col >= DD + D, jnp.exp(dec), dec)

    # output slab: [lower_flat | dec_mu | diag_var | mu | logvar]  -- 2 stores
    out_ref[:, 0:DD + 2 * D] = dec
    out_ref[:, DD + 2 * D:DD + 2 * D + 2 * L] = enc


# ---------------------------------------------------------------------------
# Parameter construction / packing
# ---------------------------------------------------------------------------
def make_params(key, data_dim, hidden_dim, latent_dim):
    """Deterministic synthetic parameters. Weights: [in, out]; biases: [1, out]."""
    tri_dim = data_dim * (data_dim - 1) // 2
    layer_shapes = {
        "fc11": (data_dim, hidden_dim),
        "fc12": (hidden_dim, hidden_dim),
        "fc21": (hidden_dim, latent_dim),
        "fc22": (hidden_dim, latent_dim),
        "fc3": (latent_dim, hidden_dim),
        "fc41": (hidden_dim, hidden_dim),
        "fc43": (hidden_dim, data_dim),
        "fc44": (hidden_dim, data_dim),
        "fc45": (hidden_dim, tri_dim),
    }
    params = {}
    for name, (fan_in, fan_out) in layer_shapes.items():
        key, kw, kb = jax.random.split(key, 3)
        scale = 1.0 / jnp.sqrt(jnp.float32(fan_in))
        params[name + "_w"] = jax.random.normal(kw, (fan_in, fan_out), jnp.float32) * scale
        params[name + "_b"] = jax.random.normal(kb, (1, fan_out), jnp.float32) * scale
    return params


def pack_params(params, data_dim, hidden_dim, latent_dim, *, weight_dtype=jnp.bfloat16):
    """One-time packing into a lane-aligned (H, 1024) weight slab + (1, 1024) bias row.

    The strict-lower-triangle scatter of fc45 is folded into its weight/bias
    columns so the kernel emits a lane-dense (TB, D*D) lower_flat directly.
    Biases stay f32 (added to the f32 MXU accumulator).
    """
    D, H, L = data_dim, hidden_dim, latent_dim
    DD = D * D
    starts, widths, kdims, w_tot = _layout(D, H, L)

    rows, cols = jnp.tril_indices(D - 1)          # row-major, matches torch.tril_indices
    flat_idx = (rows + 1) * D + cols
    w45s = jnp.zeros((H, DD), jnp.float32).at[:, flat_idx].set(params["fc45_w"])
    b45s = jnp.zeros((1, DD), jnp.float32).at[:, flat_idx].set(params["fc45_b"])

    segs_w = [
        params["fc11_w"], params["fc12_w"],
        jnp.concatenate([params["fc21_w"], params["fc22_w"]], axis=1),
        params["fc3_w"], params["fc41_w"],
        jnp.concatenate([w45s, params["fc43_w"], params["fc44_w"]], axis=1),
    ]
    segs_b = [
        params["fc11_b"], params["fc12_b"],
        jnp.concatenate([params["fc21_b"], params["fc22_b"]], axis=1),
        params["fc3_b"], params["fc41_b"],
        jnp.concatenate([b45s, params["fc43_b"], params["fc44_b"]], axis=1),
    ]

    w_slab = jnp.zeros((H, w_tot), jnp.float32)
    b_slab = jnp.zeros((1, w_tot), jnp.float32)
    for start, width, kdim, wseg, bseg in zip(starts, widths, kdims, segs_w, segs_b):
        w_slab = w_slab.at[0:kdim, start:start + width].set(wseg)
        b_slab = b_slab.at[:, start:start + width].set(bseg)
    return w_slab.astype(weight_dtype), b_slab


# ---------------------------------------------------------------------------
# Batch-tile selection
# ---------------------------------------------------------------------------
def _choose_batch_tile(B):
    # Target 1024-row tiles: amortizes per-step pipeline overhead (~0.35us) and
    # fills the MXU M dim; double-buffered blocks stay ~3 MB (<< v5e's 16 MiB
    # scoped-VMEM default, << v7x's 64 MiB physical).  For moderate B, split
    # into >=2 tiles so the ("parallel",) batch axis shards across both v7x
    # TensorCores.  Tiles are multiples of 8 (f32 sublane).
    target = 1024
    if B <= 8:
        return 8
    if B <= 2 * target:
        half = (B + 1) // 2
        return ((half + 7) // 8) * 8
    return target


# ---------------------------------------------------------------------------
# Forward wrapper
# ---------------------------------------------------------------------------
@functools.partial(jax.jit, static_argnames=("data_dim", "hidden_dim", "latent_dim"))
def vae_forward(x, eps, w_slab, b_slab, *, data_dim, hidden_dim, latent_dim):
    B = x.shape[0]
    D, H, L = data_dim, hidden_dim, latent_dim
    DD = D * D
    out_w = DD + 2 * D + 2 * L                 # 304 for D=16, L=8 (lane-dense)
    starts, _, _, w_tot = _layout(D, H, L)
    assert w_slab.shape == (H, w_tot) and b_slab.shape == (1, w_tot)

    # cdiv-based batch tiling with zero padding (no single-huge-block cliff)
    TB = _choose_batch_tile(B)
    grid_b = pl.cdiv(B, TB)
    B_pad = grid_b * TB
    if B_pad != B:
        x = jnp.pad(x, ((0, B_pad - B), (0, 0)))
        eps = jnp.pad(eps, ((0, B_pad - B), (0, 0)))

    kernel = functools.partial(vae_fused_kernel, D=D, H=H, L=L, seg=tuple(starts))

    flops = 2 * B_pad * (D * H + H * H + H * 2 * L + L * H + H * H + H * (DD + 2 * D))
    transcendentals = B_pad * (2 * H + L + DD + 2 * D)
    bytes_accessed = (4 * B_pad * (D + L) + w_slab.dtype.itemsize * H * w_tot
                      + 4 * w_tot + 4 * B_pad * out_w)

    out = pl.pallas_call(
        kernel,
        out_shape=jax.ShapeDtypeStruct((B_pad, out_w), jnp.float32),
        grid=(grid_b,),
        in_specs=[
            pl.BlockSpec((TB, D), lambda i: (i, 0)),
            pl.BlockSpec((TB, L), lambda i: (i, 0)),
            pl.BlockSpec((H, w_tot), lambda i: (0, 0)),   # weights resident
            pl.BlockSpec((1, w_tot), lambda i: (0, 0)),   # biases resident
        ],
        out_specs=pl.BlockSpec((TB, out_w), lambda i: (i, 0)),
        compiler_params=pltpu.CompilerParams(dimension_semantics=("parallel",)),
        cost_estimate=pl.CostEstimate(flops=flops, transcendentals=transcendentals,
                                      bytes_accessed=bytes_accessed),
    )(x, eps, w_slab, b_slab)

    out = out[:B]
    lower_flat = out[:, 0:DD]
    dec_mu = out[:, DD:DD + D]
    diag_var = out[:, DD + D:DD + 2 * D]
    mu = out[:, DD + 2 * D:DD + 2 * D + L]
    logvar = out[:, DD + 2 * D + L:DD + 2 * D + 2 * L]

    # TODO(synk): cov assembly (lower ⊙ lowerᵀ + diagonal overwrite) stays in
    # XLA; fusing the per-row DxD minor-dim transpose into the kernel needs an
    # XLU-lowering check (pl.lower_as_mlir) and is skipped for robustness.
    lower = lower_flat.reshape(B, D, D)
    cov = lower * jnp.swapaxes(lower, 1, 2)
    eye = jnp.eye(D, dtype=bool)
    cov = jnp.where(eye[None, :, :], diag_var[:, :, None], cov)

    return dec_mu, cov, mu, logvar


# ---------------------------------------------------------------------------
# Pure-JAX reference (mirrors the PyTorch module exactly, full f32 matmuls)
# ---------------------------------------------------------------------------
def _reference_forward(x, eps, params, data_dim):
    D = data_dim
    hp = jax.lax.Precision.HIGHEST
    lin = lambda h, n: jnp.dot(h, params[n + "_w"], precision=hp) + params[n + "_b"]
    h1 = jnp.tanh(lin(x, "fc11"))
    h1 = _leaky_relu(lin(h1, "fc12"))
    mu = lin(h1, "fc21")
    logvar = lin(h1, "fc22")
    z = mu + eps * jnp.exp(0.5 * logvar)
    h3 = _leaky_relu(lin(z, "fc3"))
    h3 = jnp.tanh(lin(h3, "fc41"))
    rows, cols = jnp.tril_indices(D - 1)
    lower = (jnp.zeros((x.shape[0], D, D), jnp.float32)
             .at[:, rows + 1, cols].set(lin(h3, "fc45")))
    cov = lower * jnp.transpose(lower, (0, 2, 1))
    idx = jnp.arange(D)
    cov = cov.at[:, idx, idx].set(jnp.exp(lin(h3, "fc44")))
    return lin(h3, "fc43"), cov, mu, logvar


if __name__ == "__main__":
    data_dim, hidden_dim, latent_dim, batch = 16, 32, 8, 8

    key = jax.random.PRNGKey(0)
    key, kx, keps, kp = jax.random.split(key, 4)
    x = jax.random.normal(kx, (batch, data_dim), jnp.float32)
    # eps corresponds to torch.randn_like(std) in reparameterize — provided
    # deterministically from the host for reproducibility.
    eps = jax.random.normal(keps, (batch, latent_dim), jnp.float32)
    params = make_params(kp, data_dim, hidden_dim, latent_dim)

    r_dec_mu, r_cov, r_mu, r_logvar = _reference_forward(x, eps, params, data_dim)
    refs = (r_dec_mu, r_cov, r_mu, r_logvar)

    # 1) f32-slab validation path: checks kernel structure (scatter fold,
    #    lane-aligned packing, output-slab layout) at tight tolerance.
    w32, b32 = pack_params(params, data_dim, hidden_dim, latent_dim,
                           weight_dtype=jnp.float32)
    out32 = vae_forward(x, eps, w32, b32, data_dim=data_dim,
                        hidden_dim=hidden_dim, latent_dim=latent_dim)
    jax.block_until_ready(out32)
    for got, ref in zip(out32, refs):
        assert jnp.allclose(got, ref, atol=1e-4, rtol=1e-4), "f32 path mismatch"

    # 2) bf16-slab production path (single-pass MXU, half weight DMA/vreg
    #    footprint); elementwise math stays f32, so tolerance is modest.
    wbf, bbf = pack_params(params, data_dim, hidden_dim, latent_dim,
                           weight_dtype=jnp.bfloat16)
    outbf = vae_forward(x, eps, wbf, bbf, data_dim=data_dim,
                        hidden_dim=hidden_dim, latent_dim=latent_dim)
    jax.block_until_ready(outbf)
    for got, ref in zip(outbf, refs):
        assert jnp.allclose(got, ref, atol=7.5e-2, rtol=7.5e-2), "bf16 path mismatch"

    # TODO(synk): `reconstruct()` samples from MultivariateNormal (Cholesky +
    # host RNG); sampling is out of scope for the forward-pass kernel.
    print("KERNEL_OK")
</pallas_src>

<mosaic_0001>
module attributes {stable_mosaic.version = 11 : i64} {
  func.func @vae_fused_kernel(%arg0: i32, %arg1: memref<8x16xf32, #tpu.memory_space<vmem>>, %arg2: memref<8x8xf32, #tpu.memory_space<vmem>>, %arg3: memref<32x1024xf32, #tpu.memory_space<vmem>>, %arg4: memref<1x1024xf32, #tpu.memory_space<vmem>>, %arg5: memref<8x304xf32, #tpu.memory_space<vmem>>) attributes {dimension_semantics = [#tpu.dimension_semantics<parallel>], iteration_bounds = array<i64: 1>, scalar_prefetch = 0 : i64, scratch_operands = 0 : i64, tpu.core_type = #tpu.core_type<tc>, window_params = [{transform_indices = @transform_0, window_bounds = array<i64: 8, 16>}, {transform_indices = @transform_1, window_bounds = array<i64: 8, 8>}, {pipeline_mode = #tpu.pipeline_mode<synchronous>, transform_indices = @transform_2, window_bounds = array<i64: 32, 1024>}, {pipeline_mode = #tpu.pipeline_mode<synchronous>, transform_indices = @transform_3, window_bounds = array<i64: 1, 1024>}, {transform_indices = @transform_4, window_bounds = array<i64: 8, 304>}]} {
    %c0 = arith.constant 0 : index
    %c0_0 = arith.constant 0 : index
    %0 = vector.load %arg1[%c0, %c0_0] : memref<8x16xf32, #tpu.memory_space<vmem>>, vector<8x16xf32>
    %c0_1 = arith.constant 0 : index
    %c0_2 = arith.constant 0 : index
    %1 = vector.load %arg2[%c0_1, %c0_2] : memref<8x8xf32, #tpu.memory_space<vmem>>, vector<8x8xf32>
    %c0_3 = arith.constant 0 : index
    %c0_4 = arith.constant 0 : index
    %2 = vector.load %arg3[%c0_3, %c0_4] : memref<32x1024xf32, #tpu.memory_space<vmem>>, vector<16x32xf32>
    %cst = arith.constant dense<0.000000e+00> : vector<8x32xf32>
    %3 = tpu.matmul %0, %2, %cst {dimension_numbers = #tpu.dot_dimension_numbers<[1], [0], [0], [1], [0, 0, 1, 1], [], []>} : vector<8x16xf32>, vector<16x32xf32>, vector<8x32xf32> -> vector<8x32xf32>
    %c0_5 = arith.constant 0 : index
    %c0_6 = arith.constant 0 : index
    %4 = vector.load %arg4[%c0_5, %c0_6] : memref<1x1024xf32, #tpu.memory_space<vmem>>, vector<1x32xf32>
    %5 = vector.broadcast %4 : vector<1x32xf32> to vector<8x32xf32>
    %6 = arith.addf %3, %5 : vector<8x32xf32>
    %7 = math.tanh %6 : vector<8x32xf32>
    %c0_7 = arith.constant 0 : index
    %c128 = arith.constant 128 : index
    %8 = vector.load %arg3[%c0_7, %c128] : memref<32x1024xf32, #tpu.memory_space<vmem>>, vector<32x32xf32>
    %cst_8 = arith.constant dense<0.000000e+00> : vector<8x32xf32>
    %9 = tpu.matmul %7, %8, %cst_8 {dimension_numbers = #tpu.dot_dimension_numbers<[1], [0], [0], [1], [0, 0, 1, 1], [], []>} : vector<8x32xf32>, vector<32x32xf32>, vector<8x32xf32> -> vector<8x32xf32>
    %c0_9 = arith.constant 0 : index
    %c128_10 = arith.constant 128 : index
    %10 = vector.load %arg4[%c0_9, %c128_10] : memref<1x1024xf32, #tpu.memory_space<vmem>>, vector<1x32xf32>
    %11 = vector.broadcast %10 : vector<1x32xf32> to vector<8x32xf32>
    %12 = arith.addf %9, %11 : vector<8x32xf32>
    %cst_11 = arith.constant 0.000000e+00 : f32
    %13 = vector.broadcast %cst_11 : f32 to vector<8x32xf32>
    %14 = arith.cmpf oge, %12, %13 : vector<8x32xf32>
    %cst_12 = arith.constant 0.00999999977 : f32
    %15 = vector.broadcast %cst_12 : f32 to vector<8x32xf32>
    %16 = arith.mulf %15, %12 : vector<8x32xf32>
    %17 = arith.select %14, %12, %16 : vector<8x32xi1>, vector<8x32xf32>
    %c0_13 = arith.constant 0 : index
    %c256 = arith.constant 256 : index
    %18 = vector.load %arg3[%c0_13, %c256] : memref<32x1024xf32, #tpu.memory_space<vmem>>, vector<32x16xf32>
    %cst_14 = arith.constant dense<0.000000e+00> : vector<8x16xf32>
    %19 = tpu.matmul %17, %18, %cst_14 {dimension_numbers = #tpu.dot_dimension_numbers<[1], [0], [0], [1], [0, 0, 1, 1], [], []>} : vector<8x32xf32>, vector<32x16xf32>, vector<8x16xf32> -> vector<8x16xf32>
    %c0_15 = arith.constant 0 : index
    %c256_16 = arith.constant 256 : index
    %20 = vector.load %arg4[%c0_15, %c256_16] : memref<1x1024xf32, #tpu.memory_space<vmem>>, vector<1x16xf32>
    %21 = vector.broadcast %20 : vector<1x16xf32> to vector<8x16xf32>
    %22 = arith.addf %19, %21 : vector<8x16xf32>
    %23 = vector.extract_strided_slice %22 {offsets = [0, 0], sizes = [8, 8], strides = [1, 1]} : vector<8x16xf32> to vector<8x8xf32>
    %24 = vector.extract_strided_slice %22 {offsets = [0, 8], sizes = [8, 8], strides = [1, 1]} : vector<8x16xf32> to vector<8x8xf32>
    %cst_17 = arith.constant 5.000000e-01 : f32
    %25 = vector.broadcast %cst_17 : f32 to vector<8x8xf32>
    %26 = arith.mulf %25, %24 : vector<8x8xf32>
    %27 = math.exp %26 : vector<8x8xf32>
    %28 = arith.mulf %1, %27 : vector<8x8xf32>
    %29 = arith.addf %23, %28 : vector<8x8xf32>
    %c0_18 = arith.constant 0 : index
    %c384 = arith.constant 384 : index
    %30 = vector.load %arg3[%c0_18, %c384] : memref<32x1024xf32, #tpu.memory_space<vmem>>, vector<8x32xf32>
    %cst_19 = arith.constant dense<0.000000e+00> : vector<8x32xf32>
    %31 = tpu.matmul %29, %30, %cst_19 {dimension_numbers = #tpu.dot_dimension_numbers<[1], [0], [0], [1], [0, 0, 1, 1], [], []>} : vector<8x8xf32>, vector<8x32xf32>, vector<8x32xf32> -> vector<8x32xf32>
    %c0_20 = arith.constant 0 : index
    %c384_21 = arith.constant 384 : index
    %32 = vector.load %arg4[%c0_20, %c384_21] : memref<1x1024xf32, #tpu.memory_space<vmem>>, vector<1x32xf32>
    %33 = vector.broadcast %32 : vector<1x32xf32> to vector<8x32xf32>
    %34 = arith.addf %31, %33 : vector<8x32xf32>
    %cst_22 = arith.constant 0.000000e+00 : f32
    %35 = vector.broadcast %cst_22 : f32 to vector<8x32xf32>
    %36 = arith.cmpf oge, %34, %35 : vector<8x32xf32>
    %cst_23 = arith.constant 0.00999999977 : f32
    %37 = vector.broadcast %cst_23 : f32 to vector<8x32xf32>
    %38 = arith.mulf %37, %34 : vector<8x32xf32>
    %39 = arith.select %36, %34, %38 : vector<8x32xi1>, vector<8x32xf32>
    %c0_24 = arith.constant 0 : index
    %c512 = arith.constant 512 : index
    %40 = vector.load %arg3[%c0_24, %c512] : memref<32x1024xf32, #tpu.memory_space<vmem>>, vector<32x32xf32>
    %cst_25 = arith.constant dense<0.000000e+00> : vector<8x32xf32>
    %41 = tpu.matmul %39, %40, %cst_25 {dimension_numbers = #tpu.dot_dimension_numbers<[1], [0], [0], [1], [0, 0, 1, 1], [], []>} : vector<8x32xf32>, vector<32x32xf32>, vector<8x32xf32> -> vector<8x32xf32>
    %c0_26 = arith.constant 0 : index
    %c512_27 = arith.constant 512 : index
    %42 = vector.load %arg4[%c0_26, %c512_27] : memref<1x1024xf32, #tpu.memory_space<vmem>>, vector<1x32xf32>
    %43 = vector.broadcast %42 : vector<1x32xf32> to vector<8x32xf32>
    %44 = arith.addf %41, %43 : vector<8x32xf32>
    %45 = math.tanh %44 : vector<8x32xf32>
    %c0_28 = arith.constant 0 : index
    %c640 = arith.constant 640 : index
    %46 = vector.load %arg3[%c0_28, %c640] : memref<32x1024xf32, #tpu.memory_space<vmem>>, vector<32x288xf32>
    %cst_29 = arith.constant dense<0.000000e+00> : vector<8x288xf32>
    %47 = tpu.matmul %45, %46, %cst_29 {dimension_numbers = #tpu.dot_dimension_numbers<[1], [0], [0], [1], [0, 0, 1, 1], [], []>} : vector<8x32xf32>, vector<32x288xf32>, vector<8x288xf32> -> vector<8x288xf32>
    %c0_30 = arith.constant 0 : index
    %c640_31 = arith.constant 640 : index
    %48 = vector.load %arg4[%c0_30, %c640_31] : memref<1x1024xf32, #tpu.memory_space<vmem>>, vector<1x288xf32>
    %49 = vector.broadcast %48 : vector<1x288xf32> to vector<8x288xf32>
    %50 = arith.addf %47, %49 : vector<8x288xf32>
    %51 = tpu.iota {dimensions = array<i32: 1>} : vector<8x288xi32>
    %c272_i32 = arith.constant 272 : i32
    %52 = vector.broadcast %c272_i32 : i32 to vector<8x288xi32>
    %53 = arith.cmpi sge, %51, %52 : vector<8x288xi32>
    %54 = math.exp %50 : vector<8x288xf32>
    %55 = arith.select %53, %54, %50 : vector<8x288xi1>, vector<8x288xf32>
    %c0_32 = arith.constant 0 : index
    %c0_33 = arith.constant 0 : index
    %56 = vector.load %arg5[%c0_32, %c0_33] : memref<8x304xf32, #tpu.memory_space<vmem>>, vector<8x288xf32>
    tpu.vector_store %arg5[%c0_32, %c0_33], %55 {strides = array<i32>} : memref<8x304xf32, #tpu.memory_space<vmem>>, vector<8x288xf32>,
    %c0_34 = arith.constant 0 : index
    %c288 = arith.constant 288 : index
    %57 = vector.load %arg5[%c0_34, %c288] : memref<8x304xf32, #tpu.memory_space<vmem>>, vector<8x16xf32>
    tpu.vector_store %arg5[%c0_34, %c288], %22 {strides = array<i32>} : memref<8x304xf32, #tpu.memory_space<vmem>>, vector<8x16xf32>,
    return
  }
  func.func @transform_0(%arg0: i32) -> (i32, i32) {
    %c0_i32 = arith.constant 0 : i32
    %c0_i32_0 = arith.constant 0 : i32
    return %arg0, %c0_i32 : i32, i32
  }
  func.func @transform_1(%arg0: i32) -> (i32, i32) {
    %c0_i32 = arith.constant 0 : i32
    %c0_i32_0 = arith.constant 0 : i32
    return %arg0, %c0_i32 : i32, i32
  }
  func.func @transform_2(%arg0: i32) -> (i32, i32) {
    %c0_i32 = arith.constant 0 : i32
    %c0_i32_0 = arith.constant 0 : i32
    %c0_i32_1 = arith.constant 0 : i32
    return %c0_i32, %c0_i32_0 : i32, i32
  }
  func.func @transform_3(%arg0: i32) -> (i32, i32) {
    %c0_i32 = arith.constant 0 : i32
    %c0_i32_0 = arith.constant 0 : i32
    %c0_i32_1 = arith.constant 0 : i32
    return %c0_i32, %c0_i32_0 : i32, i32
  }
  func.func @transform_4(%arg0: i32) -> (i32, i32) {
    %c0_i32 = arith.constant 0 : i32
    %c0_i32_0 = arith.constant 0 : i32
    return %arg0, %c0_i32 : i32, i32
  }
}

</mosaic_0001>

<llo_original>
// kernel: vae_forward.1
$region0: #{vae_forward.1}
  #allocation0 [shape = 'u32[]', space=smem, size = 0x4, offset = 0x4, fixed_abs, tag = 'smem constant byte address 0x4 - core index']
  #allocation1 [shape = 'u32[144,128]{1,0:T(1,128)}', space=vmem, size = 0x12000, scoped, tag = 'internal scratch']
  %s0 = inlined_call_operand.hbm [shape: f32[8,16], index: 0, kind: input, shape index: {}]
  %s1 = inlined_call_operand.hbm [shape: f32[8,8], index: 1, kind: input, shape index: {}]
  %s2 = inlined_call_operand.hbm [shape: f32[32,1024], index: 2, kind: input, shape index: {}]
  %s3 = inlined_call_operand.vmem [shape: f32[1,1024], index: 3, kind: input, shape index: {}]
  %s4 = inlined_call_operand.vmem [shape: f32[8,304], index: 4, kind: output, shape index: {}]
  %s5 = sld [smem:[#allocation0]]
  $region38: #{vae_forward.1} parent=0
    _
  %s7 = ssub.s32 1, %s5
  %s8 = scalar_select 0, %s7, %s5
  $region1: #{vae_forward.1} parent=0
    #allocation2 [shape = 'u8[4096]{0}', space=vmem, size = 0x1000, scoped, tag = 'input window, operand 0, single buffered']
    #allocation3 [shape = 's32[1]{0}', space=sflag, size = 0x4, scoped, tag = 'scoped memory for vae_forward.1']
    #allocation4 [shape = 'u8[4096]{0}', space=vmem, size = 0x1000, scoped, tag = 'input window, operand 1, single buffered']
    #allocation5 [shape = 's32[1]{0}', space=sflag, size = 0x4, scoped, tag = 'scoped memory for vae_forward.1']
    #allocation6 [shape = 'u8[131072]{0}', space=vmem, size = 0x20000, scoped, tag = 'input window, operand 2, single buffered']
    %9 = vsyncpa [#allocation3], 0
    %10 = vsyncpa [#allocation5], 0
    // Predicated region
    $region2: #{vae_forward.1} parent=1 // pred_check
      _
    $region3: #{vae_forward.1} parent=1 // pred_check_branch
      %12 = sbr.rel (0) target = $region5
    $region4: #{vae_forward.1} parent=1 // pred_region
      %s14 = ssub.s32 128, 128
      %15 = vsyncadd [#allocation3], %s14
      %s17 = sshll.u32 [#allocation2], 4
      %s18 = int_to_ptr.vmem [resolvable:$true] %s17
      %20 = dma.hbm_to_vmem [thread:$0]  %s0, 128, %s18, [#allocation3]
    $region5: #{vae_forward.1} parent=1 // pred_fallthru
      _
    // Predicated region
    $region6: #{vae_forward.1} parent=1 // pred_check
      _
    $region7: #{vae_forward.1} parent=1 // pred_check_branch
      %22 = sbr.rel (0) target = $region9
    $region8: #{vae_forward.1} parent=1 // pred_region
      %s24 = ssub.s32 128, 128
      %25 = vsyncadd [#allocation5], %s24
      %s27 = sshll.u32 [#allocation4], 4
      %s28 = int_to_ptr.vmem [resolvable:$true] %s27
      %30 = dma.hbm_to_vmem [thread:$0]  %s1, 128, %s28, [#allocation5]
    $region9: #{vae_forward.1} parent=1 // pred_fallthru
      _
    // Predicated region
    $region10: #{vae_forward.1} parent=1 // pred_check
      _
    $region11: #{vae_forward.1} parent=1 // pred_check_branch
      %32 = sbr.rel (0) target = $region13
    $region12: #{vae_forward.1} parent=1 // pred_region
      %s34 = ssub.s32 4096, 4096
      %35 = vsyncadd [#allocation5], %s34
      %s36 = sshll.u32 [#allocation6], 4
      %s37 = int_to_ptr.vmem [resolvable:$true] %s36
      %42 = dma.hbm_to_vmem [thread:$0]  %s2, 4096, %s37, [#allocation5], 1024, 1024, 64
    $region13: #{vae_forward.1} parent=1 // pred_fallthru
      _
    // Predicated region
    $region14: #{vae_forward.1} parent=1 // pred_check
      _
    $region15: #{vae_forward.1} parent=1 // pred_check_branch
      %44 = sbr.rel (0) target = $region17
    $region16: #{vae_forward.1} parent=1 // pred_region
      _
    $region17: #{vae_forward.1} parent=1 // pred_fallthru
      _
    // Predicated region
    $region18: #{vae_forward.1} parent=1 // pred_check
      _
    $region19: #{vae_forward.1} parent=1 // pred_check_branch
      %46 = sbr.rel (0) target = $region21
    $region20: #{vae_forward.1} parent=1 // pred_region
      %47 = dma.done [#allocation3], 128
    $region21: #{vae_forward.1} parent=1 // pred_fallthru
      _
    // Predicated region
    $region22: #{vae_forward.1} parent=1 // pred_check
      _
    $region23: #{vae_forward.1} parent=1 // pred_check_branch
      %49 = sbr.rel (0) target = $region25
    $region24: #{vae_forward.1} parent=1 // pred_region
      %50 = dma.done [#allocation5], 128
    $region25: #{vae_forward.1} parent=1 // pred_fallthru
      _
    // Predicated region
    $region26: #{vae_forward.1} parent=1 // pred_check
      _
    $region27: #{vae_forward.1} parent=1 // pred_check_branch
      %52 = sbr.rel (0) target = $region29
    $region28: #{vae_forward.1} parent=1 // pred_region
      %53 = dma.done [#allocation5], 4096
    $region29: #{vae_forward.1} parent=1 // pred_fallthru
      _
    %v54 = vld [vmem:[#allocation2] sm:$0xff]
    %v55 = vld [vmem:[#allocation4] sm:$0xff]
    %v56 = vld [vmem:[#allocation6] sm:$0xff]
    %v57 = vld [vmem:[#allocation6 + $0x40] sm:$0xff]
    %v58 = vld [vmem:[%s3] sm:$0x1]
    %v60 = vlaneseq
    %v61 = vshrl.u32 %v60, 7
    %v62 = vsub.s32 0, %v61
    %v63 = vrot.slane %v58, %v62
    %vm65 = vcmask 130048
    %v67 = vsel %vm65, %v54, 0
    %69 = vmatprep.subr.mxu0 0.0
    %70 = vmatpush1.msra.mxu0 %v56
    %71 = vmatprep.subr.mxu0 0.0
    %72 = vmatpush1.msra.mxu0 %v57
    %73 = vmatprep.subr.mxu0 0.0
    %74 = vmatpush1.msra.mxu0 0.0
    %75 = vmatprep.subr.mxu0 0.0
    %76 = vmatpush1.msra.mxu0 0.0
    %77 = vmatprep.subr.mxu0 0.0
    %78 = vmatpush1.msra.mxu0 0.0
    %79 = vmatprep.subr.mxu0 0.0
    %80 = vmatpush1.msra.mxu0 0.0
    %81 = vmatprep.subr.mxu0 0.0
    %82 = vmatpush1.msra.mxu0 0.0
    %83 = vmatprep.subr.mxu0 0.0
    %84 = vmatpush1.msra.mxu0 0.0
    %85 = vmatprep.subr.mxu0 0.0
    %86 = vmatpush1.msra.mxu0 0.0
    %87 = vmatprep.subr.mxu0 0.0
    %88 = vmatpush1.msra.mxu0 0.0
    %89 = vmatprep.subr.mxu0 0.0
    %90 = vmatpush1.msra.mxu0 0.0
    %91 = vmatprep.subr.mxu0 0.0
    %92 = vmatpush1.msra.mxu0 0.0
    %93 = vmatprep.subr.mxu0 0.0
    %94 = vmatpush1.msra.mxu0 0.0
    %95 = vmatprep.subr.mxu0 0.0
    %96 = vmatpush1.msra.mxu0 0.0
    %97 = vmatprep.subr.mxu0 0.0
    %98 = vmatpush1.msra.mxu0 0.0
    %99 = vmatprep.subr.mxu0 0.0
    %100 = vmatpush1.msra.mxu0 0.0
    %101 = vmatprep.subr.mxu0 0.0
    %102 = vmatpush1.msra.mxu0 0.0
    %103 = vmatprep.subr.mxu0 0.0
    %104 = vmatpush1.msra.mxu0 0.0
    %105 = vmatprep.subr.mxu0 0.0
    %106 = vmatpush1.msra.mxu0 0.0
    %107 = vmatprep.subr.mxu0 0.0
    %108 = vmatpush1.msra.mxu0 0.0
    %109 = vmatprep.subr.mxu0 0.0
    %110 = vmatpush1.msra.mxu0 0.0
    %111 = vmatprep.subr.mxu0 0.0
    %112 = vmatpush1.msra.mxu0 0.0
    %113 = vmatprep.subr.mxu0 0.0
    %114 = vmatpush1.msra.mxu0 0.0
    %115 = vmatprep.subr.mxu0 0.0
    %116 = vmatpush1.msra.mxu0 0.0
    %117 = vmatprep.subr.mxu0 0.0
    %118 = vmatpush1.msra.mxu0 0.0
    %119 = vmatprep.subr.mxu0 0.0
    %120 = vmatpush1.msra.mxu0 0.0
    %121 = vmatprep.subr.mxu0 0.0
    %122 = vmatpush1.msra.mxu0 0.0
    %123 = vmatprep.subr.mxu0 0.0
    %124 = vmatpush1.msra.mxu0 0.0
    %125 = vmatprep.subr.mxu0 0.0
    %126 = vmatpush1.msra.mxu0 0.0
    %127 = vmatprep.subr.mxu0 0.0
    %128 = vmatpush1.msra.mxu0 0.0
    %129 = vmatprep.subr.mxu0 0.0
    %130 = vmatpush1.msra.mxu0 0.0
    %131 = vmatprep.subr.mxu0 0.0
    %132 = vmatpush1.msra.mxu0 0.0
    %133 = vmatprep.mubr.f32.mxu0 0.0
    %134 = vmatmul.mubr.f32.gmra.mrb[0].mxu0 %v67
    %v135 = vpop.f32.mrb[0].mxu0
    %v136 = vadd.f32 %v63, %v135
    %v137 = vpop.f32.mrb[0].mxu0
    %138 = vdwg.mxu0
    %v139 = vtanh.pop %v136
    %v140 = vld [vmem:[#allocation6 + $0x8] sm:$0xff]
    %v141 = vld [vmem:[#allocation6 + $0x48] sm:$0xff]
    %v142 = vld [vmem:[#allocation6 + $0x88] sm:$0xff]
    %v143 = vld [vmem:[#allocation6 + $0xc8] sm:$0xff]
    %v144 = vld [vmem:[%s3 + $0x1] sm:$0x1]
    %v146 = vlaneseq
    %v147 = vshrl.u32 %v146, 7
    %v148 = vsub.s32 0, %v147
    %v149 = vrot.slane %v144, %v148
    %vm151 = vcmask 261120
    %v153 = vsel %vm151, %v139, 0
    %155 = vmatprep.subr.mxu0 0.0
    %156 = vmatpush1.msra.mxu0 %v140
    %157 = vmatprep.subr.mxu0 0.0
    %158 = vmatpush1.msra.mxu0 %v141
    %159 = vmatprep.subr.mxu0 0.0
    %160 = vmatpush1.msra.mxu0 %v142
    %161 = vmatprep.subr.mxu0 0.0
    %162 = vmatpush1.msra.mxu0 %v143
    %163 = vmatprep.subr.mxu0 0.0
    %164 = vmatpush1.msra.mxu0 0.0
    %165 = vmatprep.subr.mxu0 0.0
    %166 = vmatpush1.msra.mxu0 0.0
    %167 = vmatprep.subr.mxu0 0.0
    %168 = vmatpush1.msra.mxu0 0.0
    %169 = vmatprep.subr.mxu0 0.0
    %170 = vmatpush1.msra.mxu0 0.0
    %171 = vmatprep.subr.mxu0 0.0
    %172 = vmatpush1.msra.mxu0 0.0
    %173 = vmatprep.subr.mxu0 0.0
    %174 = vmatpush1.msra.mxu0 0.0
    %175 = vmatprep.subr.mxu0 0.0
    %176 = vmatpush1.msra.mxu0 0.0
    %177 = vmatprep.subr.mxu0 0.0
    %178 = vmatpush1.msra.mxu0 0.0
    %179 = vmatprep.subr.mxu0 0.0
    %180 = vmatpush1.msra.mxu0 0.0
    %181 = vmatprep.subr.mxu0 0.0
    %182 = vmatpush1.msra.mxu0 0.0
    %183 = vmatprep.subr.mxu0 0.0
    %184 = vmatpush1.msra.mxu0 0.0
    %185 = vmatprep.subr.mxu0 0.0
    %186 = vmatpush1.msra.mxu0 0.0
    %187 = vmatprep.subr.mxu0 0.0
    %188 = vmatpush1.msra.mxu0 0.0
    %189 = vmatprep.subr.mxu0 0.0
    %190 = vmatpush1.msra.mxu0 0.0
    %191 = vmatprep.subr.mxu0 0.0
    %192 = vmatpush1.msra.mxu0 0.0
    %193 = vmatprep.subr.mxu0 0.0
    %194 = vmatpush1.msra.mxu0 0.0
    %195 = vmatprep.subr.mxu0 0.0
    %196 = vmatpush1.msra.mxu0 0.0
    %197 = vmatprep.subr.mxu0 0.0
    %198 = vmatpush1.msra.mxu0 0.0
    %199 = vmatprep.subr.mxu0 0.0
    %200 = vmatpush1.msra.mxu0 0.0
    %201 = vmatprep.subr.mxu0 0.0
    %202 = vmatpush1.msra.mxu0 0.0
    %203 = vmatprep.subr.mxu0 0.0
    %204 = vmatpush1.msra.mxu0 0.0
    %205 = vmatprep.subr.mxu0 0.0
    %206 = vmatpush1.msra.mxu0 0.0
    %207 = vmatprep.subr.mxu0 0.0
    %208 = vmatpush1.msra.mxu0 0.0
    %209 = vmatprep.subr.mxu0 0.0
    %210 = vmatpush1.msra.mxu0 0.0
    %211 = vmatprep.subr.mxu0 0.0
    %212 = vmatpush1.msra.mxu0 0.0
    %213 = vmatprep.subr.mxu0 0.0
    %214 = vmatpush1.msra.mxu0 0.0
    %215 = vmatprep.subr.mxu0 0.0
    %216 = vmatpush1.msra.mxu0 0.0
    %217 = vmatprep.subr.mxu0 0.0
    %218 = vmatpush1.msra.mxu0 0.0
    %219 = vmatprep.mubr.f32.mxu0 0.0
    %220 = vmatmul.mubr.f32.gmra.mrb[0].mxu0 %v153
    %v221 = vpop.f32.mrb[0].mxu0
    %v222 = vadd.f32 %v149, %v221
    %v223 = vpop.f32.mrb[0].mxu0
    %224 = vdwg.mxu0
    %vm225 = vcmp.ge.f32.partialorder %v222, 0.0
    %v226 = vmul.f32 %v222, 0.01
    %v227 = vsel %vm225, %v222, %v226
    %v228 = vld [vmem:[#allocation6 + $0x10] sm:$0xff]
    %v229 = vld [vmem:[#allocation6 + $0x50] sm:$0xff]
    %v230 = vld [vmem:[#allocation6 + $0x90] sm:$0xff]
    %v231 = vld [vmem:[#allocation6 + $0xd0] sm:$0xff]
    %v232 = vld [vmem:[%s3 + $0x2] sm:$0x1]
    %v234 = vlaneseq
    %v235 = vshrl.u32 %v234, 7
    %v236 = vsub.s32 0, %v235
    %v237 = vrot.slane %v232, %v236
    %v240 = vsel %vm151, %v227, 0
    %242 = vmatprep.subr.mxu0 0.0
    %243 = vmatpush1.msra.mxu0 %v228
    %244 = vmatprep.subr.mxu0 0.0
    %245 = vmatpush1.msra.mxu0 %v229
    %246 = vmatprep.subr.mxu0 0.0
    %247 = vmatpush1.msra.mxu0 %v230
    %248 = vmatprep.subr.mxu0 0.0
    %249 = vmatpush1.msra.mxu0 %v231
    %250 = vmatprep.subr.mxu0 0.0
    %251 = vmatpush1.msra.mxu0 0.0
    %252 = vmatprep.subr.mxu0 0.0
    %253 = vmatpush1.msra.mxu0 0.0
    %254 = vmatprep.subr.mxu0 0.0
    %255 = vmatpush1.msra.mxu0 0.0
    %256 = vmatprep.subr.mxu0 0.0
    %257 = vmatpush1.msra.mxu0 0.0
    %258 = vmatprep.subr.mxu0 0.0
    %259 = vmatpush1.msra.mxu0 0.0
    %260 = vmatprep.subr.mxu0 0.0
    %261 = vmatpush1.msra.mxu0 0.0
    %262 = vmatprep.subr.mxu0 0.0
    %263 = vmatpush1.msra.mxu0 0.0
    %264 = vmatprep.subr.mxu0 0.0
    %265 = vmatpush1.msra.mxu0 0.0
    %266 = vmatprep.subr.mxu0 0.0
    %267 = vmatpush1.msra.mxu0 0.0
    %268 = vmatprep.subr.mxu0 0.0
    %269 = vmatpush1.msra.mxu0 0.0
    %270 = vmatprep.subr.mxu0 0.0
    %271 = vmatpush1.msra.mxu0 0.0
    %272 = vmatprep.subr.mxu0 0.0
    %273 = vmatpush1.msra.mxu0 0.0
    %274 = vmatprep.subr.mxu0 0.0
    %275 = vmatpush1.msra.mxu0 0.0
    %276 = vmatprep.subr.mxu0 0.0
    %277 = vmatpush1.msra.mxu0 0.0
    %278 = vmatprep.subr.mxu0 0.0
    %279 = vmatpush1.msra.mxu0 0.0
    %280 = vmatprep.subr.mxu0 0.0
    %281 = vmatpush1.msra.mxu0 0.0
    %282 = vmatprep.subr.mxu0 0.0
    %283 = vmatpush1.msra.mxu0 0.0
    %284 = vmatprep.subr.mxu0 0.0
    %285 = vmatpush1.msra.mxu0 0.0
    %286 = vmatprep.subr.mxu0 0.0
    %287 = vmatpush1.msra.mxu0 0.0
    %288 = vmatprep.subr.mxu0 0.0
    %289 = vmatpush1.msra.mxu0 0.0
    %290 = vmatprep.subr.mxu0 0.0
    %291 = vmatpush1.msra.mxu0 0.0
    %292 = vmatprep.subr.mxu0 0.0
    %293 = vmatpush1.msra.mxu0 0.0
    %294 = vmatprep.subr.mxu0 0.0
    %295 = vmatpush1.msra.mxu0 0.0
    %296 = vmatprep.subr.mxu0 0.0
    %297 = vmatpush1.msra.mxu0 0.0
    %298 = vmatprep.subr.mxu0 0.0
    %299 = vmatpush1.msra.mxu0 0.0
    %300 = vmatprep.subr.mxu0 0.0
    %301 = vmatpush1.msra.mxu0 0.0
    %302 = vmatprep.subr.mxu0 0.0
    %303 = vmatpush1.msra.mxu0 0.0
    %304 = vmatprep.subr.mxu0 0.0
    %305 = vmatpush1.msra.mxu0 0.0
    %306 = vmatprep.mubr.f32.mxu0 0.0
    %307 = vmatmul.mubr.f32.gmra.mrb[0].mxu0 %v240
    %v308 = vpop.f32.mrb[0].mxu0
    %v309 = vadd.f32 %v237, %v308
    %v310 = vpop.f32.mrb[0].mxu0
    %311 = vdwg.mxu0
    %v312 = vmul.f32 %v309, 0.5
    %v313 = vmul.f32 %v312, 1.442695
    %v314 = vpow.pop %v313
    %316 = vrot.lane.b32.xlu0 %v314, 120
    %v317 = vpop.permute.xlu0 %316
    %v319 = vmul.f32 %v55, %v317
    %v320 = vadd.f32 %v309, %v319
    %v321 = vld [vmem:[#allocation6 + $0x18] sm:$0xff]
    %v322 = vld [vmem:[%s3 + $0x3] sm:$0x1]
    %v324 = vlaneseq
    %v325 = vshrl.u32 %v324, 7
    %v326 = vsub.s32 0, %v325
    %v327 = vrot.slane %v322, %v326
    %vm329 = vcmask 64512
    %v331 = vsel %vm329, %v320, 0
    %333 = vmatprep.subr.mxu0 0.0
    %334 = vmatpush1.msra.mxu0 %v321
    %335 = vmatprep.subr.mxu0 0.0
    %336 = vmatpush1.msra.mxu0 0.0
    %337 = vmatprep.subr.mxu0 0.0
    %338 = vmatpush1.msra.mxu0 0.0
    %339 = vmatprep.subr.mxu0 0.0
    %340 = vmatpush1.msra.mxu0 0.0
    %341 = vmatprep.subr.mxu0 0.0
    %342 = vmatpush1.msra.mxu0 0.0
    %343 = vmatprep.subr.mxu0 0.0
    %344 = vmatpush1.msra.mxu0 0.0
    %345 = vmatprep.subr.mxu0 0.0
    %346 = vmatpush1.msra.mxu0 0.0
    %347 = vmatprep.subr.mxu0 0.0
    %348 = vmatpush1.msra.mxu0 0.0
    %349 = vmatprep.subr.mxu0 0.0
    %350 = vmatpush1.msra.mxu0 0.0
    %351 = vmatprep.subr.mxu0 0.0
    %352 = vmatpush1.msra.mxu0 0.0
    %353 = vmatprep.subr.mxu0 0.0
    %354 = vmatpush1.msra.mxu0 0.0
    %355 = vmatprep.subr.mxu0 0.0
    %356 = vmatpush1.msra.mxu0 0.0
    %357 = vmatprep.subr.mxu0 0.0
    %358 = vmatpush1.msra.mxu0 0.0
    %359 = vmatprep.subr.mxu0 0.0
    %360 = vmatpush1.msra.mxu0 0.0
    %361 = vmatprep.subr.mxu0 0.0
    %362 = vmatpush1.msra.mxu0 0.0
    %363 = vmatprep.subr.mxu0 0.0
    %364 = vmatpush1.msra.mxu0 0.0
    %365 = vmatprep.subr.mxu0 0.0
    %366 = vmatpush1.msra.mxu0 0.0
    %367 = vmatprep.subr.mxu0 0.0
    %368 = vmatpush1.msra.mxu0 0.0
    %369 = vmatprep.subr.mxu0 0.0
    %370 = vmatpush1.msra.mxu0 0.0
    %371 = vmatprep.subr.mxu0 0.0
    %372 = vmatpush1.msra.mxu0 0.0
    %373 = vmatprep.subr.mxu0 0.0
    %374 = vmatpush1.msra.mxu0 0.0
    %375 = vmatprep.subr.mxu0 0.0
    %376 = vmatpush1.msra.mxu0 0.0
    %377 = vmatprep.subr.mxu0 0.0
    %378 = vmatpush1.msra.mxu0 0.0
    %379 = vmatprep.subr.mxu0 0.0
    %380 = vmatpush1.msra.mxu0 0.0
    %381 = vmatprep.subr.mxu0 0.0
    %382 = vmatpush1.msra.mxu0 0.0
    %383 = vmatprep.subr.mxu0 0.0
    %384 = vmatpush1.msra.mxu0 0.0
    %385 = vmatprep.subr.mxu0 0.0
    %386 = vmatpush1.msra.mxu0 0.0
    %387 = vmatprep.subr.mxu0 0.0
    %388 = vmatpush1.msra.mxu0 0.0
    %389 = vmatprep.subr.mxu0 0.0
    %390 = vmatpush1.msra.mxu0 0.0
    %391 = vmatprep.subr.mxu0 0.0
    %392 = vmatpush1.msra.mxu0 0.0
    %393 = vmatprep.subr.mxu0 0.0
    %394 = vmatpush1.msra.mxu0 0.0
    %395 = vmatprep.subr.mxu0 0.0
    %396 = vmatpush1.msra.mxu0 0.0
    %397 = vmatprep.mubr.f32.mxu0 0.0
    %398 = vmatmul.mubr.f32.gmra.mrb[0].mxu0 %v331
    %v399 = vpop.f32.mrb[0].mxu0
    %v400 = vadd.f32 %v327, %v399
    %v401 = vpop.f32.mrb[0].mxu0
    %402 = vdwg.mxu0
    %vm403 = vcmp.ge.f32.partialorder %v400, 0.0
    %v404 = vmul.f32 %v400, 0.01
    %v405 = vsel %vm403, %v400, %v404
    %v406 = vld [vmem:[#allocation6 + $0x20] sm:$0xff]
    %v407 = vld [vmem:[#allocation6 + $0x60] sm:$0xff]
    %v408 = vld [vmem:[#allocation6 + $0xa0] sm:$0xff]
    %v409 = vld [vmem:[#allocation6 + $0xe0] sm:$0xff]
    %v410 = vld [vmem:[%s3 + $0x4] sm:$0x1]
    %v412 = vlaneseq
    %v413 = vshrl.u32 %v412, 7
    %v414 = vsub.s32 0, %v413
    %v415 = vrot.slane %v410, %v414
    %v418 = vsel %vm151, %v405, 0
    %420 = vmatprep.subr.mxu0 0.0
    %421 = vmatpush1.msra.mxu0 %v406
    %422 = vmatprep.subr.mxu0 0.0
    %423 = vmatpush1.msra.mxu0 %v407
    %424 = vmatprep.subr.mxu0 0.0
    %425 = vmatpush1.msra.mxu0 %v408
    %426 = vmatprep.subr.mxu0 0.0
    %427 = vmatpush1.msra.mxu0 %v409
    %428 = vmatprep.subr.mxu0 0.0
    %429 = vmatpush1.msra.mxu0 0.0
    %430 = vmatprep.subr.mxu0 0.0
    %431 = vmatpush1.msra.mxu0 0.0
    %432 = vmatprep.subr.mxu0 0.0
    %433 = vmatpush1.msra.mxu0 0.0
    %434 = vmatprep.subr.mxu0 0.0
    %435 = vmatpush1.msra.mxu0 0.0
    %436 = vmatprep.subr.mxu0 0.0
    %437 = vmatpush1.msra.mxu0 0.0
    %438 = vmatprep.subr.mxu0 0.0
    %439 = vmatpush1.msra.mxu0 0.0
    %440 = vmatprep.subr.mxu0 0.0
    %441 = vmatpush1.msra.mxu0 0.0
    %442 = vmatprep.subr.mxu0 0.0
    %443 = vmatpush1.msra.mxu0 0.0
    %444 = vmatprep.subr.mxu0 0.0
    %445 = vmatpush1.msra.mxu0 0.0
    %446 = vmatprep.subr.mxu0 0.0
    %447 = vmatpush1.msra.mxu0 0.0
    %448 = vmatprep.subr.mxu0 0.0
    %449 = vmatpush1.msra.mxu0 0.0
    %450 = vmatprep.subr.mxu0 0.0
    %451 = vmatpush1.msra.mxu0 0.0
    %452 = vmatprep.subr.mxu0 0.0
    %453 = vmatpush1.msra.mxu0 0.0
    %454 = vmatprep.subr.mxu0 0.0
    %455 = vmatpush1.msra.mxu0 0.0
    %456 = vmatprep.subr.mxu0 0.0
    %457 = vmatpush1.msra.mxu0 0.0
    %458 = vmatprep.subr.mxu0 0.0
    %459 = vmatpush1.msra.mxu0 0.0
    %460 = vmatprep.subr.mxu0 0.0
    %461 = vmatpush1.msra.mxu0 0.0
    %462 = vmatprep.subr.mxu0 0.0
    %463 = vmatpush1.msra.mxu0 0.0
    %464 = vmatprep.subr.mxu0 0.0
    %465 = vmatpush1.msra.mxu0 0.0
    %466 = vmatprep.subr.mxu0 0.0
    %467 = vmatpush1.msra.mxu0 0.0
    %468 = vmatprep.subr.mxu0 0.0
    %469 = vmatpush1.msra.mxu0 0.0
    %470 = vmatprep.subr.mxu0 0.0
    %471 = vmatpush1.msra.mxu0 0.0
    %472 = vmatprep.subr.mxu0 0.0
    %473 = vmatpush1.msra.mxu0 0.0
    %474 = vmatprep.subr.mxu0 0.0
    %475 = vmatpush1.msra.mxu0 0.0
    %476 = vmatprep.subr.mxu0 0.0
    %477 = vmatpush1.msra.mxu0 0.0
    %478 = vmatprep.subr.mxu0 0.0
    %479 = vmatpush1.msra.mxu0 0.0
    %480 = vmatprep.subr.mxu0 0.0
    %481 = vmatpush1.msra.mxu0 0.0
    %482 = vmatprep.subr.mxu0 0.0
    %483 = vmatpush1.msra.mxu0 0.0
    %484 = vmatprep.mubr.f32.mxu0 0.0
    %485 = vmatmul.mubr.f32.gmra.mrb[0].mxu0 %v418
    %v486 = vpop.f32.mrb[0].mxu0
    %v487 = vadd.f32 %v415, %v486
    %v488 = vpop.f32.mrb[0].mxu0
    %489 = vdwg.mxu0
    %v490 = vtanh.pop %v487
    %v491 = vld [vmem:[#allocation6 + $0x28] sm:$0xff]
    %v492 = vld [vmem:[#allocation6 + $0x30] sm:$0xff]
    %v493 = vld [vmem:[#allocation6 + $0x38] sm:$0xff]
    %v494 = vld [vmem:[#allocation6 + $0x68] sm:$0xff]
    %v495 = vld [vmem:[#allocation6 + $0x70] sm:$0xff]
    %v496 = vld [vmem:[#allocation6 + $0x78] sm:$0xff]
    %v497 = vld [vmem:[#allocation6 + $0xa8] sm:$0xff]
    %v498 = vld [vmem:[#allocation6 + $0xb0] sm:$0xff]
    %v499 = vld [vmem:[#allocation6 + $0xb8] sm:$0xff]
    %v500 = vld [vmem:[#allocation6 + $0xe8] sm:$0xff]
    %v501 = vld [vmem:[#allocation6 + $0xf0] sm:$0xff]
    %v502 = vld [vmem:[#allocation6 + $0xf8] sm:$0xff]
    %v503 = vld [vmem:[%s3 + $0x5] sm:$0x7]
    %v505 = vlaneseq
    %v506 = vshrl.u32 %v505, 7
    %v507 = vsub.s32 0, %v506
    %v508 = vrot.slane %v503, %v507
    %v509 = vlaneseq
    %v510 = vshrl.u32 %v509, 7
    %v511 = vsub.s32 1, %v510
    %v512 = vrot.slane %v503, %v511
    %v513 = vlaneseq
    %v514 = vshrl.u32 %v513, 7
    %v515 = vsub.s32 2, %v514
    %v516 = vrot.slane %v503, %v515
    %v521 = vsel %vm151, %v490, 0
    %523 = vmatprep.subr.mxu0 %v492
    %524 = vmatpush1.msra.mxu0 %v491
    %525 = vmatprep.subr.mxu0 %v495
    %526 = vmatpush1.msra.mxu0 %v494
    %527 = vmatprep.subr.mxu0 %v498
    %528 = vmatpush1.msra.mxu0 %v497
    %529 = vmatprep.subr.mxu0 %v501
    %530 = vmatpush1.msra.mxu0 %v500
    %531 = vmatprep.subr.mxu0 0.0
    %532 = vmatpush1.msra.mxu0 0.0
    %533 = vmatprep.subr.mxu0 0.0
    %534 = vmatpush1.msra.mxu0 0.0
    %535 = vmatprep.subr.mxu0 0.0
    %536 = vmatpush1.msra.mxu0 0.0
    %537 = vmatprep.subr.mxu0 0.0
    %538 = vmatpush1.msra.mxu0 0.0
    %539 = vmatprep.subr.mxu0 0.0
    %540 = vmatpush1.msra.mxu0 0.0
    %541 = vmatprep.subr.mxu0 0.0
    %542 = vmatpush1.msra.mxu0 0.0
    %543 = vmatprep.subr.mxu0 0.0
    %544 = vmatpush1.msra.mxu0 0.0
    %545 = vmatprep.subr.mxu0 0.0
    %546 = vmatpush1.msra.mxu0 0.0
    %547 = vmatprep.subr.mxu0 0.0
    %548 = vmatpush1.msra.mxu0 0.0
    %549 = vmatprep.subr.mxu0 0.0
    %550 = vmatpush1.msra.mxu0 0.0
    %551 = vmatprep.subr.mxu0 0.0
    %552 = vmatpush1.msra.mxu0 0.0
    %553 = vmatprep.subr.mxu0 0.0
    %554 = vmatpush1.msra.mxu0 0.0
    %555 = vmatprep.subr.mxu0 0.0
    %556 = vmatpush1.msra.mxu0 0.0
    %557 = vmatprep.subr.mxu0 0.0
    %558 = vmatpush1.msra.mxu0 0.0
    %559 = vmatprep.subr.mxu0 0.0
    %560 = vmatpush1.msra.mxu0 0.0
    %561 = vmatprep.subr.mxu0 0.0
    %562 = vmatpush1.msra.mxu0 0.0
    %563 = vmatprep.subr.mxu0 0.0
    %564 = vmatpush1.msra.mxu0 0.0
    %565 = vmatprep.subr.mxu0 0.0
    %566 = vmatpush1.msra.mxu0 0.0
    %567 = vmatprep.subr.mxu0 0.0
    %568 = vmatpush1.msra.mxu0 0.0
    %569 = vmatprep.subr.mxu0 0.0
    %570 = vmatpush1.msra.mxu0 0.0
    %571 = vmatprep.subr.mxu0 0.0
    %572 = vmatpush1.msra.mxu0 0.0
    %573 = vmatprep.subr.mxu0 0.0
    %574 = vmatpush1.msra.mxu0 0.0
    %575 = vmatprep.subr.mxu0 0.0
    %576 = vmatpush1.msra.mxu0 0.0
    %577 = vmatprep.subr.mxu0 0.0
    %578 = vmatpush1.msra.mxu0 0.0
    %579 = vmatprep.subr.mxu0 0.0
    %580 = vmatpush1.msra.mxu0 0.0
    %581 = vmatprep.subr.mxu0 0.0
    %582 = vmatpush1.msra.mxu0 0.0
    %583 = vmatprep.subr.mxu0 0.0
    %584 = vmatpush1.msra.mxu0 0.0
    %585 = vmatprep.subr.mxu0 0.0
    %586 = vmatpush1.msra.mxu0 0.0
    %587 = vmatprep.mubr.f32.mxu0 0.0
    %588 = vmatmul.mubr.f32.gmra.mrb[0].mxu0 %v521
    %v589 = vpop.f32.mrb[0].mxu0
    %v590 = vadd.f32 %v508, %v589
    %v591 = vpop.f32.mrb[0].mxu0
    %v592 = vadd.f32 %v512, %v591
    %593 = vdwg.mxu0
    %594 = vmatprep.subr.mxu0 0.0
    %595 = vmatpush1.msra.mxu0 %v493
    %596 = vmatprep.subr.mxu0 0.0
    %597 = vmatpush1.msra.mxu0 %v496
    %598 = vmatprep.subr.mxu0 0.0
    %599 = vmatpush1.msra.mxu0 %v499
    %600 = vmatprep.subr.mxu0 0.0
    %601 = vmatpush1.msra.mxu0 %v502
    %602 = vmatprep.subr.mxu0 0.0
    %603 = vmatpush1.msra.mxu0 0.0
    %604 = vmatprep.subr.mxu0 0.0
    %605 = vmatpush1.msra.mxu0 0.0
    %606 = vmatprep.subr.mxu0 0.0
    %607 = vmatpush1.msra.mxu0 0.0
    %608 = vmatprep.subr.mxu0 0.0
    %609 = vmatpush1.msra.mxu0 0.0
    %610 = vmatprep.subr.mxu0 0.0
    %611 = vmatpush1.msra.mxu0 0.0
    %612 = vmatprep.subr.mxu0 0.0
    %613 = vmatpush1.msra.mxu0 0.0
    %614 = vmatprep.subr.mxu0 0.0
    %615 = vmatpush1.msra.mxu0 0.0
    %616 = vmatprep.subr.mxu0 0.0
    %617 = vmatpush1.msra.mxu0 0.0
    %618 = vmatprep.subr.mxu0 0.0
    %619 = vmatpush1.msra.mxu0 0.0
    %620 = vmatprep.subr.mxu0 0.0
    %621 = vmatpush1.msra.mxu0 0.0
    %622 = vmatprep.subr.mxu0 0.0
    %623 = vmatpush1.msra.mxu0 0.0
    %624 = vmatprep.subr.mxu0 0.0
    %625 = vmatpush1.msra.mxu0 0.0
    %626 = vmatprep.subr.mxu0 0.0
    %627 = vmatpush1.msra.mxu0 0.0
    %628 = vmatprep.subr.mxu0 0.0
    %629 = vmatpush1.msra.mxu0 0.0
    %630 = vmatprep.subr.mxu0 0.0
    %631 = vmatpush1.msra.mxu0 0.0
    %632 = vmatprep.subr.mxu0 0.0
    %633 = vmatpush1.msra.mxu0 0.0
    %634 = vmatprep.subr.mxu0 0.0
    %635 = vmatpush1.msra.mxu0 0.0
    %636 = vmatprep.subr.mxu0 0.0
    %637 = vmatpush1.msra.mxu0 0.0
    %638 = vmatprep.subr.mxu0 0.0
    %639 = vmatpush1.msra.mxu0 0.0
    %640 = vmatprep.subr.mxu0 0.0
    %641 = vmatpush1.msra.mxu0 0.0
    %642 = vmatprep.subr.mxu0 0.0
    %643 = vmatpush1.msra.mxu0 0.0
    %644 = vmatprep.subr.mxu0 0.0
    %645 = vmatpush1.msra.mxu0 0.0
    %646 = vmatprep.subr.mxu0 0.0
    %647 = vmatpush1.msra.mxu0 0.0
    %648 = vmatprep.subr.mxu0 0.0
    %649 = vmatpush1.msra.mxu0 0.0
    %650 = vmatprep.subr.mxu0 0.0
    %651 = vmatpush1.msra.mxu0 0.0
    %652 = vmatprep.subr.mxu0 0.0
    %653 = vmatpush1.msra.mxu0 0.0
    %654 = vmatprep.subr.mxu0 0.0
    %655 = vmatpush1.msra.mxu0 0.0
    %656 = vmatprep.subr.mxu0 0.0
    %657 = vmatpush1.msra.mxu0 0.0
    %658 = vmatprep.mubr.f32.mxu0 0.0
    %659 = vmatmul.mubr.f32.gmra.mrb[0].mxu0 %v521
    %v660 = vpop.f32.mrb[0].mxu0
    %v661 = vadd.f32 %v516, %v660
    %v662 = vpop.f32.mrb[0].mxu0
    %663 = vdwg.mxu0
    %v664 = vlaneseq
    %v665 = vand.u32 %v664, 127
    %v666 = vadd.s32 %v665, 128
    %v667 = vadd.s32 %v665, 256
    %vm668 = vcmp.ge.s32.totalorder %v665, 272
    %vm669 = vcmp.ge.s32.totalorder %v666, 272
    %vm670 = vcmp.ge.s32.totalorder %v667, 272
    %v671 = vmul.f32 %v590, 1.442695
    %v672 = vpow.pop %v671
    %v673 = vmul.f32 %v592, 1.442695
    %v674 = vpow.pop %v673
    %v675 = vmul.f32 %v661, 1.442695
    %v676 = vpow.pop %v675
    %v677 = vsel %vm668, %v672, %v590
    %v678 = vsel %vm669, %v674, %v592
    %v679 = vsel %vm670, %v676, %v661
    %680 = vst [vmem:[%s4] sm:$0xff] %v677
    %681 = vst [vmem:[%s4 + $0x8] sm:$0xff] %v678
    %682 = vst.msk [vmem:[%s4 + $0x10] sm:$0xff] %vm151, %v679
    %684 = vrot.lane.b32.xlu0 %v309, 32
    %v685 = vpop.permute.xlu0 %684
    %vm687 = vcmask 392448
    %688 = vst.msk [vmem:[%s4 + $0x10] sm:$0xff] %vm687, %v685
    // Predicated region
    $region30: #{vae_forward.1} parent=1 // pred_check
      _
    $region31: #{vae_forward.1} parent=1 // pred_check_branch
      %690 = sbr.rel (0) target = $region33
    $region32: #{vae_forward.1} parent=1 // pred_region
      _
    $region33: #{vae_forward.1} parent=1 // pred_fallthru
      _
    // Predicated region
    $region34: #{vae_forward.1} parent=1 // pred_check
      _
    $region35: #{vae_forward.1} parent=1 // pred_check_branch
      %692 = sbr.rel (0) target = $region37
    $region36: #{vae_forward.1} parent=1 // pred_region
      _
    $region37: #{vae_forward.1} parent=1 // pred_fallthru
      _
    %693 = vsyncpa [#allocation3], 1
    %694 = vsyncpa [#allocation5], 1

</llo_original>
